<compile_context>
chip_gen: v6e
topology: v6e:2x2x1
jax: 0.10.0
libtpu: 0.0.40
codegen_flags: <defaults>
</compile_context>

<pallas_src>
import functools

import jax
import jax.numpy as jnp
from jax.experimental import pallas as pl
from jax.experimental.pallas import tpu as pltpu


def _channel_attention_kernel(x_ref, w1_ref, b1_ref, w2_ref, b2_ref, o_ref, *,
                              hw_true):
    """x_ref: (Bt, C, HW_pad) tile in native dtype; weights in f32."""
    bt, c, hw_pad = x_ref.shape

    # ---- Global pooling over the lane-dense (possibly zero-padded) spatial axis.
    # Zero padding does not affect the sum; divide by the true spatial size.
    avg = jnp.sum(x_ref[...], axis=-1, dtype=jnp.float32) * (1.0 / hw_true)  # (Bt, C)

    if hw_pad != hw_true:
        lane = jax.lax.broadcasted_iota(jnp.int32, (1, 1, hw_pad), 2)
        if jnp.issubdtype(x_ref.dtype, jnp.floating):
            fill = jnp.asarray(-jnp.inf, dtype=x_ref.dtype)
        else:
            fill = jnp.asarray(jnp.iinfo(x_ref.dtype).min, dtype=x_ref.dtype)
        x_for_max = jnp.where(lane < hw_true, x_ref[...], fill)
    else:
        x_for_max = x_ref[...]
    mx = jnp.max(x_for_max, axis=-1).astype(jnp.float32)                     # (Bt, C)

    # ---- Shared two-layer MLP (fc1 -> leaky_relu(0.01) -> fc2), one call per
    # pooled vector (two tiny matmuls each; avoids sublane concat/split relayout).
    w1 = w1_ref[...]                                   # (C, Cr)  = fc1.weight^T
    b1 = b1_ref[...]                                   # (1, Cr)
    w2 = w2_ref[...]                                   # (Cr, C)  = fc2.weight^T
    b2 = b2_ref[...]                                   # (1, C)

    def mlp(v):
        h = jnp.dot(v, w1, preferred_element_type=jnp.float32) + b1
        h = jnp.where(h > 0, h, 0.01 * h)              # F.leaky_relu default slope
        return jnp.dot(h, w2, preferred_element_type=jnp.float32) + b2

    attn = jax.nn.sigmoid(mlp(avg) + mlp(mx))          # (Bt, C), f32

    # ---- Channel-wise rescale, streamed directly from the VMEM input buffer
    # (no full-tile value kept live across the MLP).
    scale = attn.astype(o_ref.dtype)[:, :, None]       # (Bt, C, 1)
    o_ref[...] = (x_ref[...] * scale).astype(o_ref.dtype)


def _choose_batch_tile(B, bytes_per_batch, target_bytes):
    """Pick the batch tile Bt (a divisor of B).

    - Tiny tensors: one grid step (Bt = B) — per-step overhead would dominate.
    - Otherwise: largest divisor whose block fits the target, preferring an
      even number of grid steps so v7x's two TensorCores split evenly.
    """
    total = B * bytes_per_batch
    if total <= target_bytes:
        return B
    divisors = [d for d in range(1, B + 1) if B % d == 0]
    fitting = [d for d in divisors if d * bytes_per_batch <= target_bytes]
    if not fitting:
        # TODO(synk): two-phase kernel for per-batch blocks larger than budget.
        return 1
    even = [d for d in fitting if (B // d) % 2 == 0]
    return max(even) if even else max(fitting)


def channel_attention(x, w1_t, b1, w2_t, b2):
    """x: (B, C, H, W). w1_t: (C, Cr), b1: (1, Cr), w2_t: (Cr, C), b2: (1, C)."""
    B, C, H, W = x.shape
    Cr = w1_t.shape[1]
    HW = H * W
    HW_pad = ((HW + 127) // 128) * 128          # lane-dense last dim

    x_flat = x.reshape(B, C, HW)
    if HW_pad != HW:
        # Zero-pad for the sum; max masks the padded lanes in-kernel.
        x_flat = jnp.pad(x_flat, ((0, 0), (0, 0), (0, HW_pad - HW)))

    itemsize = jnp.dtype(x.dtype).itemsize
    bytes_per_batch = C * HW_pad * itemsize

    # ---- Generation-aware VMEM budgeting.
    try:
        vmem_cap = int(pltpu.get_tpu_info().vmem_capacity_bytes)
    except Exception:
        vmem_cap = 128 << 20                    # v5e/v6e default
    vmem_budget = (3 * vmem_cap) // 4           # ~48 MiB on v7x, ~96 MiB on v5e/v6e
    w_bytes = sum(int(a.size) * jnp.dtype(a.dtype).itemsize
                  for a in (w1_t, b1, w2_t, b2))
    headroom = 2 << 20
    # 2x(in) + 2x(out) double buffers per block must fit the budget.
    max_block = max(1 << 20, (vmem_budget - w_bytes - headroom) // 4)
    target_block = min(8 << 20, max_block)      # HBM-roofline knee is ~4-8 MiB

    Bt = _choose_batch_tile(B, bytes_per_batch, target_block)
    grid_b = B // Bt
    block_bytes = Bt * bytes_per_batch

    required = 4 * block_bytes + w_bytes + headroom
    # Never clamp below what the pipeline actually needs; cap at physical VMEM.
    vmem_limit = int(min(vmem_cap, max(required, 16 << 20)))

    cost = pl.CostEstimate(
        flops=int(8 * B * C * Cr + 3 * B * C * HW_pad),
        transcendentals=int(B * C),
        bytes_accessed=int(2 * B * C * HW_pad * itemsize),
    )

    kernel = functools.partial(_channel_attention_kernel, hw_true=HW)

    out_flat = pl.pallas_call(
        kernel,
        out_shape=jax.ShapeDtypeStruct((B, C, HW_pad), x.dtype),
        grid_spec=pltpu.PrefetchScalarGridSpec(
            num_scalar_prefetch=0,
            grid=(grid_b,),
            in_specs=[
                pl.BlockSpec((Bt, C, HW_pad), lambda b: (b, 0, 0)),
                pl.BlockSpec((C, Cr), lambda b: (0, 0)),   # grid-invariant
                pl.BlockSpec((1, Cr), lambda b: (0, 0)),
                pl.BlockSpec((Cr, C), lambda b: (0, 0)),
                pl.BlockSpec((1, C), lambda b: (0, 0)),
            ],
            out_specs=pl.BlockSpec((Bt, C, HW_pad), lambda b: (b, 0, 0)),
        ),
        compiler_params=pltpu.CompilerParams(
            dimension_semantics=("parallel",),
            vmem_limit_bytes=vmem_limit,
        ),
        cost_estimate=cost,
    )(x_flat, w1_t, b1, w2_t, b2)

    if HW_pad != HW:
        out_flat = out_flat[:, :, :HW]
    return out_flat.reshape(B, C, H, W)


def reference(x, w1_t, b1, w2_t, b2):
    """Pure-JAX reference mirroring the PyTorch forward."""
    avg = jnp.mean(x, axis=(2, 3))
    mx = jnp.max(x, axis=(2, 3))

    def mlp(v):
        h = v @ w1_t + b1
        h = jnp.where(h > 0, h, 0.01 * h)
        return h @ w2_t + b2

    attn = jax.nn.sigmoid(mlp(avg) + mlp(mx))
    return x * attn[:, :, None, None]


if __name__ == "__main__":
    # Small shapes consistent with the module: channels divisible by
    # reduction_ratio -> channels=32, reduction_ratio=4.
    B, C, H, W = 2, 32, 16, 16
    reduction_ratio = 4
    Cr = C // reduction_ratio

    key = jax.random.PRNGKey(0)
    kx, k1, k2, k3, k4 = jax.random.split(key, 5)

    x = jax.random.normal(kx, (B, C, H, W), dtype=jnp.float32)

    # nn.Linear params stored pre-transposed for row-vector matmuls:
    # fc1.weight (Cr, C) -> w1_t (C, Cr); fc2.weight (C, Cr) -> w2_t (Cr, C).
    w1_t = jax.random.normal(k1, (C, Cr), dtype=jnp.float32) * 0.1
    b1 = jax.random.normal(k2, (1, Cr), dtype=jnp.float32) * 0.1
    w2_t = jax.random.normal(k3, (Cr, C), dtype=jnp.float32) * 0.1
    b2 = jax.random.normal(k4, (1, C), dtype=jnp.float32) * 0.1

    out = channel_attention(x, w1_t, b1, w2_t, b2)
    out = jax.block_until_ready(out)

    ref = reference(x, w1_t, b1, w2_t, b2)
    assert out.shape == (B, C, H, W)
    assert jnp.allclose(out, ref, atol=1e-5, rtol=1e-5), "mismatch vs reference"

    print("KERNEL_OK")
</pallas_src>

<mosaic_0001>
module attributes {stable_mosaic.version = 11 : i64} {
  func.func @_channel_attention_kernel(%arg0: i32, %arg1: memref<2x32x256xf32, #tpu.memory_space<vmem>>, %arg2: memref<32x8xf32, #tpu.memory_space<vmem>>, %arg3: memref<1x8xf32, #tpu.memory_space<vmem>>, %arg4: memref<8x32xf32, #tpu.memory_space<vmem>>, %arg5: memref<1x32xf32, #tpu.memory_space<vmem>>, %arg6: memref<2x32x256xf32, #tpu.memory_space<vmem>>) attributes {dimension_semantics = [#tpu.dimension_semantics<parallel>], iteration_bounds = array<i64: 1>, scalar_prefetch = 0 : i64, scratch_operands = 0 : i64, tpu.core_type = #tpu.core_type<tc>, window_params = [{transform_indices = @transform_0, window_bounds = array<i64: 2, 32, 256>}, {pipeline_mode = #tpu.pipeline_mode<synchronous>, transform_indices = @transform_1, window_bounds = array<i64: 32, 8>}, {pipeline_mode = #tpu.pipeline_mode<synchronous>, transform_indices = @transform_2, window_bounds = array<i64: 1, 8>}, {pipeline_mode = #tpu.pipeline_mode<synchronous>, transform_indices = @transform_3, window_bounds = array<i64: 8, 32>}, {pipeline_mode = #tpu.pipeline_mode<synchronous>, transform_indices = @transform_4, window_bounds = array<i64: 1, 32>}, {transform_indices = @transform_5, window_bounds = array<i64: 2, 32, 256>}]} {
    %c0 = arith.constant 0 : index
    %c0_0 = arith.constant 0 : index
    %c0_1 = arith.constant 0 : index
    %0 = vector.load %arg1[%c0, %c0_0, %c0_1] : memref<2x32x256xf32, #tpu.memory_space<vmem>>, vector<2x32x256xf32>
    %cst = arith.constant dense<0.000000e+00> : vector<2x32xf32>
    %1 = vector.multi_reduction <add>, %0, %cst [2] : vector<2x32x256xf32> to vector<2x32xf32>
    %cst_2 = arith.constant 3.906250e-03 : f32
    %2 = vector.broadcast %cst_2 : f32 to vector<2x32xf32>
    %3 = arith.mulf %1, %2 : vector<2x32xf32>
    %c0_3 = arith.constant 0 : index
    %c0_4 = arith.constant 0 : index
    %c0_5 = arith.constant 0 : index
    %4 = vector.load %arg1[%c0_3, %c0_4, %c0_5] : memref<2x32x256xf32, #tpu.memory_space<vmem>>, vector<2x32x256xf32>
    %cst_6 = arith.constant dense<0xFF800000> : vector<2x32xf32>
    %5 = vector.multi_reduction <maximumf>, %4, %cst_6 [2] : vector<2x32x256xf32> to vector<2x32xf32>
    %c0_7 = arith.constant 0 : index
    %c0_8 = arith.constant 0 : index
    %6 = vector.load %arg2[%c0_7, %c0_8] : memref<32x8xf32, #tpu.memory_space<vmem>>, vector<32x8xf32>
    %c0_9 = arith.constant 0 : index
    %c0_10 = arith.constant 0 : index
    %7 = vector.load %arg3[%c0_9, %c0_10] : memref<1x8xf32, #tpu.memory_space<vmem>>, vector<1x8xf32>
    %c0_11 = arith.constant 0 : index
    %c0_12 = arith.constant 0 : index
    %8 = vector.load %arg4[%c0_11, %c0_12] : memref<8x32xf32, #tpu.memory_space<vmem>>, vector<8x32xf32>
    %c0_13 = arith.constant 0 : index
    %c0_14 = arith.constant 0 : index
    %9 = vector.load %arg5[%c0_13, %c0_14] : memref<1x32xf32, #tpu.memory_space<vmem>>, vector<1x32xf32>
    %cst_15 = arith.constant dense<0.000000e+00> : vector<2x8xf32>
    %10 = tpu.matmul %3, %6, %cst_15 {dimension_numbers = #tpu.dot_dimension_numbers<[1], [0], [0], [1], [0, 0, 1, 1], [], []>} : vector<2x32xf32>, vector<32x8xf32>, vector<2x8xf32> -> vector<2x8xf32>
    %11 = vector.broadcast %7 : vector<1x8xf32> to vector<2x8xf32>
    %12 = arith.addf %10, %11 : vector<2x8xf32>
    %cst_16 = arith.constant 0.000000e+00 : f32
    %13 = vector.broadcast %cst_16 : f32 to vector<2x8xf32>
    %14 = arith.cmpf ogt, %12, %13 : vector<2x8xf32>
    %cst_17 = arith.constant 0.00999999977 : f32
    %15 = vector.broadcast %cst_17 : f32 to vector<2x8xf32>
    %16 = arith.mulf %15, %12 : vector<2x8xf32>
    %17 = arith.select %14, %12, %16 : vector<2x8xi1>, vector<2x8xf32>
    %cst_18 = arith.constant dense<0.000000e+00> : vector<2x32xf32>
    %18 = tpu.matmul %17, %8, %cst_18 {dimension_numbers = #tpu.dot_dimension_numbers<[1], [0], [0], [1], [0, 0, 1, 1], [], []>} : vector<2x8xf32>, vector<8x32xf32>, vector<2x32xf32> -> vector<2x32xf32>
    %19 = vector.broadcast %9 : vector<1x32xf32> to vector<2x32xf32>
    %20 = arith.addf %18, %19 : vector<2x32xf32>
    %cst_19 = arith.constant dense<0.000000e+00> : vector<2x8xf32>
    %21 = tpu.matmul %5, %6, %cst_19 {dimension_numbers = #tpu.dot_dimension_numbers<[1], [0], [0], [1], [0, 0, 1, 1], [], []>} : vector<2x32xf32>, vector<32x8xf32>, vector<2x8xf32> -> vector<2x8xf32>
    %22 = vector.broadcast %7 : vector<1x8xf32> to vector<2x8xf32>
    %23 = arith.addf %21, %22 : vector<2x8xf32>
    %cst_20 = arith.constant 0.000000e+00 : f32
    %24 = vector.broadcast %cst_20 : f32 to vector<2x8xf32>
    %25 = arith.cmpf ogt, %23, %24 : vector<2x8xf32>
    %cst_21 = arith.constant 0.00999999977 : f32
    %26 = vector.broadcast %cst_21 : f32 to vector<2x8xf32>
    %27 = arith.mulf %26, %23 : vector<2x8xf32>
    %28 = arith.select %25, %23, %27 : vector<2x8xi1>, vector<2x8xf32>
    %cst_22 = arith.constant dense<0.000000e+00> : vector<2x32xf32>
    %29 = tpu.matmul %28, %8, %cst_22 {dimension_numbers = #tpu.dot_dimension_numbers<[1], [0], [0], [1], [0, 0, 1, 1], [], []>} : vector<2x8xf32>, vector<8x32xf32>, vector<2x32xf32> -> vector<2x32xf32>
    %30 = vector.broadcast %9 : vector<1x32xf32> to vector<2x32xf32>
    %31 = arith.addf %29, %30 : vector<2x32xf32>
    %32 = arith.addf %20, %31 : vector<2x32xf32>
    %33 = arith.negf %32 : vector<2x32xf32>
    %34 = math.exp %33 : vector<2x32xf32>
    %cst_23 = arith.constant 1.000000e+00 : f32
    %35 = vector.broadcast %cst_23 : f32 to vector<2x32xf32>
    %36 = arith.addf %35, %34 : vector<2x32xf32>
    %37 = arith.divf %35, %36 : vector<2x32xf32>
    %38 = vector.shape_cast %37 : vector<2x32xf32> to vector<2x32x1xf32>
    %c0_24 = arith.constant 0 : index
    %c0_25 = arith.constant 0 : index
    %c0_26 = arith.constant 0 : index
    %39 = vector.load %arg1[%c0_24, %c0_25, %c0_26] : memref<2x32x256xf32, #tpu.memory_space<vmem>>, vector<2x32x256xf32>
    %40 = vector.broadcast %38 : vector<2x32x1xf32> to vector<2x32x256xf32>
    %41 = arith.mulf %39, %40 : vector<2x32x256xf32>
    %c0_27 = arith.constant 0 : index
    %c0_28 = arith.constant 0 : index
    %c0_29 = arith.constant 0 : index
    %42 = vector.load %arg6[%c0_27, %c0_28, %c0_29] : memref<2x32x256xf32, #tpu.memory_space<vmem>>, vector<2x32x256xf32>
    tpu.vector_store %arg6[%c0_27, %c0_28, %c0_29], %41 {strides = array<i32>} : memref<2x32x256xf32, #tpu.memory_space<vmem>>, vector<2x32x256xf32>,
    return
  }
  func.func @transform_0(%arg0: i32) -> (i32, i32, i32) {
    %c0_i32 = arith.constant 0 : i32
    %c0_i32_0 = arith.constant 0 : i32
    %c0_i32_1 = arith.constant 0 : i32
    return %arg0, %c0_i32, %c0_i32_0 : i32, i32, i32
  }
  func.func @transform_1(%arg0: i32) -> (i32, i32) {
    %c0_i32 = arith.constant 0 : i32
    %c0_i32_0 = arith.constant 0 : i32
    %c0_i32_1 = arith.constant 0 : i32
    return %c0_i32, %c0_i32_0 : i32, i32
  }
  func.func @transform_2(%arg0: i32) -> (i32, i32) {
    %c0_i32 = arith.constant 0 : i32
    %c0_i32_0 = arith.constant 0 : i32
    %c0_i32_1 = arith.constant 0 : i32
    return %c0_i32, %c0_i32_0 : i32, i32
  }
  func.func @transform_3(%arg0: i32) -> (i32, i32) {
    %c0_i32 = arith.constant 0 : i32
    %c0_i32_0 = arith.constant 0 : i32
    %c0_i32_1 = arith.constant 0 : i32
    return %c0_i32, %c0_i32_0 : i32, i32
  }
  func.func @transform_4(%arg0: i32) -> (i32, i32) {
    %c0_i32 = arith.constant 0 : i32
    %c0_i32_0 = arith.constant 0 : i32
    %c0_i32_1 = arith.constant 0 : i32
    return %c0_i32, %c0_i32_0 : i32, i32
  }
  func.func @transform_5(%arg0: i32) -> (i32, i32, i32) {
    %c0_i32 = arith.constant 0 : i32
    %c0_i32_0 = arith.constant 0 : i32
    %c0_i32_1 = arith.constant 0 : i32
    return %arg0, %c0_i32, %c0_i32_0 : i32, i32, i32
  }
}

</mosaic_0001>

<llo_original>
// kernel: tpu_custom_call.1
$region0: #{tpu_custom_call.1}
  #allocation0 [shape = 'u32[]', space=smem, size = 0x4, offset = 0x4, fixed_abs, tag = 'smem constant byte address 0x4 - core index']
  #allocation1 [shape = 'u32[144,128]{1,0:T(1,128)}', space=vmem, size = 0x12000, scoped, tag = 'internal scratch']
  %s0 = inlined_call_operand.hbm [shape: f32[2,32,256], index: 0, kind: input, shape index: {}]
  %s1 = inlined_call_operand.vmem [shape: f32[32,8], index: 1, kind: input, shape index: {}]
  %s2 = inlined_call_operand.vmem [shape: f32[1,8], index: 2, kind: input, shape index: {}]
  %s3 = inlined_call_operand.vmem [shape: f32[8,32], index: 3, kind: input, shape index: {}]
  %s4 = inlined_call_operand.vmem [shape: f32[1,32], index: 4, kind: input, shape index: {}]
  %s5 = inlined_call_operand.hbm [shape: f32[2,32,256], index: 5, kind: output, shape index: {}]
  %s6 = sld [smem:[#allocation0]]
  $region34: #{tpu_custom_call.1} parent=0
    _
  %s8 = ssub.s32 1, %s6
  %s9 = scalar_select 0, %s8, %s6
  $region1: #{tpu_custom_call.1} parent=0
    #allocation2 [shape = 'u8[65536]{0}', space=vmem, size = 0x10000, scoped, tag = 'input window, operand 0, single buffered']
    #allocation3 [shape = 's32[1]{0}', space=sflag, size = 0x4, scoped, tag = 'scoped memory for tpu_custom_call.1']
    #allocation4 [shape = 's32[1]{0}', space=sflag, size = 0x4, scoped, tag = 'scoped memory for tpu_custom_call.1']
    #allocation5 [shape = 'u8[65536]{0}', space=vmem, size = 0x10000, scoped, tag = 'output window, operand 0, single buffered']
    %10 = vsyncpa [#allocation3], 0
    %11 = vsyncpa [#allocation4], 0
    // Predicated region
    $region2: #{tpu_custom_call.1} parent=1 // pred_check
      _
    $region3: #{tpu_custom_call.1} parent=1 // pred_check_branch
      %13 = sbr.rel (0) target = $region5
    $region4: #{tpu_custom_call.1} parent=1 // pred_region
      %s15 = ssub.s32 2048, 2048
      %16 = vsyncadd [#allocation3], %s15
      %s17 = sshll.u32 [#allocation2], 4
      %s18 = int_to_ptr.vmem [resolvable:$true] %s17
      %23 = dma.hbm_to_vmem [thread:$0]  %s0, 2048, %s18, [#allocation3], 256, 256, 16
    $region5: #{tpu_custom_call.1} parent=1 // pred_fallthru
      _
    // Predicated region
    $region6: #{tpu_custom_call.1} parent=1 // pred_check
      _
    $region7: #{tpu_custom_call.1} parent=1 // pred_check_branch
      %25 = sbr.rel (0) target = $region9
    $region8: #{tpu_custom_call.1} parent=1 // pred_region
      _
    $region9: #{tpu_custom_call.1} parent=1 // pred_fallthru
      _
    // Predicated region
    $region10: #{tpu_custom_call.1} parent=1 // pred_check
      _
    $region11: #{tpu_custom_call.1} parent=1 // pred_check_branch
      %27 = sbr.rel (0) target = $region13
    $region12: #{tpu_custom_call.1} parent=1 // pred_region
      _
    $region13: #{tpu_custom_call.1} parent=1 // pred_fallthru
      _
    // Predicated region
    $region14: #{tpu_custom_call.1} parent=1 // pred_check
      _
    $region15: #{tpu_custom_call.1} parent=1 // pred_check_branch
      %29 = sbr.rel (0) target = $region17
    $region16: #{tpu_custom_call.1} parent=1 // pred_region
      _
    $region17: #{tpu_custom_call.1} parent=1 // pred_fallthru
      _
    // Predicated region
    $region18: #{tpu_custom_call.1} parent=1 // pred_check
      _
    $region19: #{tpu_custom_call.1} parent=1 // pred_check_branch
      %31 = sbr.rel (0) target = $region21
    $region20: #{tpu_custom_call.1} parent=1 // pred_region
      _
    $region21: #{tpu_custom_call.1} parent=1 // pred_fallthru
      _
    // Predicated region
    $region22: #{tpu_custom_call.1} parent=1 // pred_check
      _
    $region23: #{tpu_custom_call.1} parent=1 // pred_check_branch
      %33 = sbr.rel (0) target = $region25
    $region24: #{tpu_custom_call.1} parent=1 // pred_region
      %34 = dma.done [#allocation3], 2048
    $region25: #{tpu_custom_call.1} parent=1 // pred_fallthru
      _
    %v35 = vld [vmem:[#allocation2] sm:$0xff]
    %v36 = vld [vmem:[#allocation2 + $0x8] sm:$0xff]
    %v37 = vld [vmem:[#allocation2 + $0x10] sm:$0xff]
    %v38 = vld [vmem:[#allocation2 + $0x18] sm:$0xff]
    %v39 = vld [vmem:[#allocation2 + $0x20] sm:$0xff]
    %v40 = vld [vmem:[#allocation2 + $0x28] sm:$0xff]
    %v41 = vld [vmem:[#allocation2 + $0x30] sm:$0xff]
    %v42 = vld [vmem:[#allocation2 + $0x38] sm:$0xff]
    %v43 = vld [vmem:[#allocation2 + $0x40] sm:$0xff]
    %v44 = vld [vmem:[#allocation2 + $0x48] sm:$0xff]
    %v45 = vld [vmem:[#allocation2 + $0x50] sm:$0xff]
    %v46 = vld [vmem:[#allocation2 + $0x58] sm:$0xff]
    %v47 = vld [vmem:[#allocation2 + $0x60] sm:$0xff]
    %v48 = vld [vmem:[#allocation2 + $0x68] sm:$0xff]
    %v49 = vld [vmem:[#allocation2 + $0x70] sm:$0xff]
    %v50 = vld [vmem:[#allocation2 + $0x78] sm:$0xff]
    %v51 = vadd.f32 %v35, %v36
    %52 = vadd.xlane.f32.xlu0 %v51
    %v53 = vpop.xlane.xlu0 %52
    %v54 = vadd.f32 %v37, %v38
    %55 = vadd.xlane.f32.xlu0 %v54
    %v56 = vpop.xlane.xlu0 %55
    %v57 = vadd.f32 %v39, %v40
    %58 = vadd.xlane.f32.xlu0 %v57
    %v59 = vpop.xlane.xlu0 %58
    %v60 = vadd.f32 %v41, %v42
    %61 = vadd.xlane.f32.xlu0 %v60
    %v62 = vpop.xlane.xlu0 %61
    %v63 = vadd.f32 %v43, %v44
    %64 = vadd.xlane.f32.xlu0 %v63
    %v65 = vpop.xlane.xlu0 %64
    %v66 = vadd.f32 %v45, %v46
    %67 = vadd.xlane.f32.xlu0 %v66
    %v68 = vpop.xlane.xlu0 %67
    %v69 = vadd.f32 %v47, %v48
    %70 = vadd.xlane.f32.xlu0 %v69
    %v71 = vpop.xlane.xlu0 %70
    %v72 = vadd.f32 %v49, %v50
    %73 = vadd.xlane.f32.xlu0 %v72
    %v74 = vpop.xlane.xlu0 %73
    %v75 = vmul.f32 %v53, 0.00390625
    %v76 = vmul.f32 %v56, 0.00390625
    %v77 = vmul.f32 %v59, 0.00390625
    %v78 = vmul.f32 %v62, 0.00390625
    %v79 = vmul.f32 %v65, 0.00390625
    %v80 = vmul.f32 %v68, 0.00390625
    %v81 = vmul.f32 %v71, 0.00390625
    %v82 = vmul.f32 %v74, 0.00390625
    %v83 = vmax.f32 %v35, %v36
    %84 = vmax.xlane.f32.xlu0 %v83
    %v85 = vpop.xlane.xlu0 %84
    %v86 = vmax.f32 %v37, %v38
    %87 = vmax.xlane.f32.xlu0 %v86
    %v88 = vpop.xlane.xlu0 %87
    %v89 = vmax.f32 %v39, %v40
    %90 = vmax.xlane.f32.xlu0 %v89
    %v91 = vpop.xlane.xlu0 %90
    %v92 = vmax.f32 %v41, %v42
    %93 = vmax.xlane.f32.xlu0 %v92
    %v94 = vpop.xlane.xlu0 %93
    %v95 = vmax.f32 %v43, %v44
    %96 = vmax.xlane.f32.xlu0 %v95
    %v97 = vpop.xlane.xlu0 %96
    %v98 = vmax.f32 %v45, %v46
    %99 = vmax.xlane.f32.xlu0 %v98
    %v100 = vpop.xlane.xlu0 %99
    %v101 = vmax.f32 %v47, %v48
    %102 = vmax.xlane.f32.xlu0 %v101
    %v103 = vpop.xlane.xlu0 %102
    %v104 = vmax.f32 %v49, %v50
    %105 = vmax.xlane.f32.xlu0 %v104
    %v106 = vpop.xlane.xlu0 %105
    %v107 = vld [vmem:[%s1] sm:$0xff]
    %v108 = vld [vmem:[%s1 + $0x8] sm:$0xff]
    %v109 = vld [vmem:[%s1 + $0x10] sm:$0xff]
    %v110 = vld [vmem:[%s1 + $0x18] sm:$0xff]
    %v111 = vld [vmem:[%s2] sm:$0x1]
    %v112 = vld [vmem:[%s3] sm:$0xff]
    %v113 = vld [vmem:[%s4] sm:$0x1]
    %v115 = vlaneseq
    %v116 = vshrl.u32 %v115, 7
    %v117 = vsub.s32 0, %v116
    %v118 = vrot.slane %v111, %v117
    %v128 = vlaneseq
    %v129 = vand.u32 %v128, 127
    %v130 = vlaneseq
    %v131 = vshrl.u32 %v130, 7
    %v132 = vsub.s32 %v129, %v131
    %v133 = vrot.slane %v75, %v132
    %v134 = vadd.s32 %v129, 4294967288
    %v135 = vlaneseq
    %v136 = vshrl.u32 %v135, 7
    %v137 = vsub.s32 %v134, %v136
    %v138 = vrot.slane %v76, %v137
    %vm139 = vcmask 130112
    %v140 = vsel %vm139, %v138, %v133
    %v141 = vadd.s32 %v129, 4294967280
    %v142 = vlaneseq
    %v143 = vshrl.u32 %v142, 7
    %v144 = vsub.s32 %v141, %v143
    %v145 = vrot.slane %v77, %v144
    %vm146 = vcmask 195712
    %v147 = vsel %vm146, %v145, %v140
    %v148 = vadd.s32 %v129, 4294967272
    %v149 = vlaneseq
    %v150 = vshrl.u32 %v149, 7
    %v151 = vsub.s32 %v148, %v150
    %v152 = vrot.slane %v78, %v151
    %vm153 = vcmask 261312
    %v154 = vsel %vm153, %v152, %v147
    %v155 = vlaneseq
    %v156 = vshrl.u32 %v155, 7
    %v157 = vsub.s32 %v129, %v156
    %v158 = vrot.slane %v79, %v157
    %v159 = vlaneseq
    %v160 = vshrl.u32 %v159, 7
    %v161 = vsub.s32 %v134, %v160
    %v162 = vrot.slane %v80, %v161
    %v163 = vsel %vm139, %v162, %v158
    %v164 = vlaneseq
    %v165 = vshrl.u32 %v164, 7
    %v166 = vsub.s32 %v141, %v165
    %v167 = vrot.slane %v81, %v166
    %v168 = vsel %vm146, %v167, %v163
    %v169 = vlaneseq
    %v170 = vshrl.u32 %v169, 7
    %v171 = vsub.s32 %v148, %v170
    %v172 = vrot.slane %v82, %v171
    %v173 = vsel %vm153, %v172, %v168
    %vm174 = vcmask 1041409
    %v175 = vsel %vm174, %v173, %v154
    %vm176 = vcmask 261120
    %v177 = vsel %vm176, %v175, 0
    %179 = vmatprep.subr.mxu0 0.0
    %180 = vmatpush1.msra.mxu0 0.0
    %181 = vmatprep.subr.mxu0 0.0
    %182 = vmatpush1.msra.mxu0 0.0
    %183 = vmatprep.subr.mxu0 0.0
    %184 = vmatpush1.msra.mxu0 0.0
    %185 = vmatprep.subr.mxu0 0.0
    %186 = vmatpush1.msra.mxu0 0.0
    %187 = vmatprep.subr.mxu0 0.0
    %188 = vmatpush1.msra.mxu0 0.0
    %189 = vmatprep.subr.mxu0 0.0
    %190 = vmatpush1.msra.mxu0 0.0
    %191 = vmatprep.subr.mxu0 0.0
    %192 = vmatpush1.msra.mxu0 0.0
    %193 = vmatprep.subr.mxu0 0.0
    %194 = vmatpush1.msra.mxu0 0.0
    %195 = vmatprep.subr.mxu0 0.0
    %196 = vmatpush1.msra.mxu0 0.0
    %197 = vmatprep.subr.mxu0 0.0
    %198 = vmatpush1.msra.mxu0 0.0
    %199 = vmatprep.subr.mxu0 0.0
    %200 = vmatpush1.msra.mxu0 0.0
    %201 = vmatprep.subr.mxu0 0.0
    %202 = vmatpush1.msra.mxu0 0.0
    %203 = vmatprep.subr.mxu0 0.0
    %204 = vmatpush1.msra.mxu0 %v110
    %205 = vmatprep.subr.mxu0 0.0
    %206 = vmatpush1.msra.mxu0 %v109
    %207 = vmatprep.subr.mxu0 0.0
    %208 = vmatpush1.msra.mxu0 %v108
    %209 = vmatprep.subr.mxu0 0.0
    %210 = vmatpush1.msra.mxu0 %v107
    %211 = vmatprep.subr.mxu0 0.0
    %212 = vmatpush2.msra.mxu0 0.0
    %213 = vmatprep.subr.mxu0 0.0
    %214 = vmatpush2.msra.mxu0 0.0
    %215 = vmatprep.subr.mxu0 0.0
    %216 = vmatpush2.msra.mxu0 0.0
    %217 = vmatprep.subr.mxu0 0.0
    %218 = vmatpush2.msra.mxu0 0.0
    %219 = vmatprep.subr.mxu0 0.0
    %220 = vmatpush2.msra.mxu0 0.0
    %221 = vmatprep.subr.mxu0 0.0
    %222 = vmatpush2.msra.mxu0 0.0
    %223 = vmatprep.subr.mxu0 0.0
    %224 = vmatpush2.msra.mxu0 0.0
    %225 = vmatprep.subr.mxu0 0.0
    %226 = vmatpush2.msra.mxu0 0.0
    %227 = vmatprep.subr.mxu0 0.0
    %228 = vmatpush2.msra.mxu0 0.0
    %229 = vmatprep.subr.mxu0 0.0
    %230 = vmatpush2.msra.mxu0 0.0
    %231 = vmatprep.subr.mxu0 0.0
    %232 = vmatpush2.msra.mxu0 0.0
    %233 = vmatprep.subr.mxu0 0.0
    %234 = vmatpush2.msra.mxu0 0.0
    %235 = vmatprep.subr.mxu0 0.0
    %236 = vmatpush2.msra.mxu0 0.0
    %237 = vmatprep.subr.mxu0 0.0
    %238 = vmatpush2.msra.mxu0 0.0
    %239 = vmatprep.subr.mxu0 0.0
    %240 = vmatpush2.msra.mxu0 0.0
    %241 = vmatprep.subr.mxu0 0.0
    %242 = vmatpush2.msra.mxu0 0.0
    %243 = vmatprep.mubr.f32.mxu0 0.0
    %244 = vmatmul.mubr.f32.gmra.mxu0 %v177
    %v245 = vpop.f32.mrf.mxu0
    %v246 = vadd.f32 %v118, %v245
    %v247 = vpop.f32.mrf.mxu0
    %248 = vdwg.mxu0
    %vm249 = vcmp.gt.f32.partialorder %v246, 0.0
    %v250 = vmul.f32 %v246, 0.01
    %v251 = vsel %vm249, %v246, %v250
    %v253 = vlaneseq
    %v254 = vshrl.u32 %v253, 7
    %v255 = vsub.s32 0, %v254
    %v256 = vrot.slane %v113, %v255
    %vm258 = vcmask 64512
    %v260 = vsel %vm258, %v251, 0
    %262 = vmatprep.subr.mxu0 0.0
    %263 = vmatpush1.msra.mxu0 0.0
    %264 = vmatprep.subr.mxu0 0.0
    %265 = vmatpush1.msra.mxu0 0.0
    %266 = vmatprep.subr.mxu0 0.0
    %267 = vmatpush1.msra.mxu0 0.0
    %268 = vmatprep.subr.mxu0 0.0
    %269 = vmatpush1.msra.mxu0 0.0
    %270 = vmatprep.subr.mxu0 0.0
    %271 = vmatpush1.msra.mxu0 0.0
    %272 = vmatprep.subr.mxu0 0.0
    %273 = vmatpush1.msra.mxu0 0.0
    %274 = vmatprep.subr.mxu0 0.0
    %275 = vmatpush1.msra.mxu0 0.0
    %276 = vmatprep.subr.mxu0 0.0
    %277 = vmatpush1.msra.mxu0 0.0
    %278 = vmatprep.subr.mxu0 0.0
    %279 = vmatpush1.msra.mxu0 0.0
    %280 = vmatprep.subr.mxu0 0.0
    %281 = vmatpush1.msra.mxu0 0.0
    %282 = vmatprep.subr.mxu0 0.0
    %283 = vmatpush1.msra.mxu0 0.0
    %284 = vmatprep.subr.mxu0 0.0
    %285 = vmatpush1.msra.mxu0 0.0
    %286 = vmatprep.subr.mxu0 0.0
    %287 = vmatpush1.msra.mxu0 0.0
    %288 = vmatprep.subr.mxu0 0.0
    %289 = vmatpush1.msra.mxu0 0.0
    %290 = vmatprep.subr.mxu0 0.0
    %291 = vmatpush1.msra.mxu0 0.0
    %292 = vmatprep.subr.mxu0 0.0
    %293 = vmatpush1.msra.mxu0 %v112
    %294 = vmatprep.subr.mxu0 0.0
    %295 = vmatpush2.msra.mxu0 0.0
    %296 = vmatprep.subr.mxu0 0.0
    %297 = vmatpush2.msra.mxu0 0.0
    %298 = vmatprep.subr.mxu0 0.0
    %299 = vmatpush2.msra.mxu0 0.0
    %300 = vmatprep.subr.mxu0 0.0
    %301 = vmatpush2.msra.mxu0 0.0
    %302 = vmatprep.subr.mxu0 0.0
    %303 = vmatpush2.msra.mxu0 0.0
    %304 = vmatprep.subr.mxu0 0.0
    %305 = vmatpush2.msra.mxu0 0.0
    %306 = vmatprep.subr.mxu0 0.0
    %307 = vmatpush2.msra.mxu0 0.0
    %308 = vmatprep.subr.mxu0 0.0
    %309 = vmatpush2.msra.mxu0 0.0
    %310 = vmatprep.subr.mxu0 0.0
    %311 = vmatpush2.msra.mxu0 0.0
    %312 = vmatprep.subr.mxu0 0.0
    %313 = vmatpush2.msra.mxu0 0.0
    %314 = vmatprep.subr.mxu0 0.0
    %315 = vmatpush2.msra.mxu0 0.0
    %316 = vmatprep.subr.mxu0 0.0
    %317 = vmatpush2.msra.mxu0 0.0
    %318 = vmatprep.subr.mxu0 0.0
    %319 = vmatpush2.msra.mxu0 0.0
    %320 = vmatprep.subr.mxu0 0.0
    %321 = vmatpush2.msra.mxu0 0.0
    %322 = vmatprep.subr.mxu0 0.0
    %323 = vmatpush2.msra.mxu0 0.0
    %324 = vmatprep.subr.mxu0 0.0
    %325 = vmatpush2.msra.mxu0 0.0
    %326 = vmatprep.mubr.f32.mxu0 0.0
    %327 = vmatmul.mubr.f32.gmra.mxu0 %v260
    %v328 = vpop.f32.mrf.mxu0
    %v329 = vadd.f32 %v256, %v328
    %v330 = vpop.f32.mrf.mxu0
    %331 = vdwg.mxu0
    %v340 = vlaneseq
    %v341 = vshrl.u32 %v340, 7
    %v342 = vsub.s32 %v129, %v341
    %v343 = vrot.slane %v85, %v342
    %v344 = vlaneseq
    %v345 = vshrl.u32 %v344, 7
    %v346 = vsub.s32 %v134, %v345
    %v347 = vrot.slane %v88, %v346
    %v348 = vsel %vm139, %v347, %v343
    %v349 = vlaneseq
    %v350 = vshrl.u32 %v349, 7
    %v351 = vsub.s32 %v141, %v350
    %v352 = vrot.slane %v91, %v351
    %v353 = vsel %vm146, %v352, %v348
    %v354 = vlaneseq
    %v355 = vshrl.u32 %v354, 7
    %v356 = vsub.s32 %v148, %v355
    %v357 = vrot.slane %v94, %v356
    %v358 = vsel %vm153, %v357, %v353
    %v359 = vlaneseq
    %v360 = vshrl.u32 %v359, 7
    %v361 = vsub.s32 %v129, %v360
    %v362 = vrot.slane %v97, %v361
    %v363 = vlaneseq
    %v364 = vshrl.u32 %v363, 7
    %v365 = vsub.s32 %v134, %v364
    %v366 = vrot.slane %v100, %v365
    %v367 = vsel %vm139, %v366, %v362
    %v368 = vlaneseq
    %v369 = vshrl.u32 %v368, 7
    %v370 = vsub.s32 %v141, %v369
    %v371 = vrot.slane %v103, %v370
    %v372 = vsel %vm146, %v371, %v367
    %v373 = vlaneseq
    %v374 = vshrl.u32 %v373, 7
    %v375 = vsub.s32 %v148, %v374
    %v376 = vrot.slane %v106, %v375
    %v377 = vsel %vm153, %v376, %v372
    %v378 = vsel %vm174, %v377, %v358
    %v379 = vsel %vm176, %v378, 0
    %381 = vmatprep.subr.mxu0 0.0
    %382 = vmatpush1.msra.mxu0 0.0
    %383 = vmatprep.subr.mxu0 0.0
    %384 = vmatpush1.msra.mxu0 0.0
    %385 = vmatprep.subr.mxu0 0.0
    %386 = vmatpush1.msra.mxu0 0.0
    %387 = vmatprep.subr.mxu0 0.0
    %388 = vmatpush1.msra.mxu0 0.0
    %389 = vmatprep.subr.mxu0 0.0
    %390 = vmatpush1.msra.mxu0 0.0
    %391 = vmatprep.subr.mxu0 0.0
    %392 = vmatpush1.msra.mxu0 0.0
    %393 = vmatprep.subr.mxu0 0.0
    %394 = vmatpush1.msra.mxu0 0.0
    %395 = vmatprep.subr.mxu0 0.0
    %396 = vmatpush1.msra.mxu0 0.0
    %397 = vmatprep.subr.mxu0 0.0
    %398 = vmatpush1.msra.mxu0 0.0
    %399 = vmatprep.subr.mxu0 0.0
    %400 = vmatpush1.msra.mxu0 0.0
    %401 = vmatprep.subr.mxu0 0.0
    %402 = vmatpush1.msra.mxu0 0.0
    %403 = vmatprep.subr.mxu0 0.0
    %404 = vmatpush1.msra.mxu0 0.0
    %405 = vmatprep.subr.mxu0 0.0
    %406 = vmatpush1.msra.mxu0 %v110
    %407 = vmatprep.subr.mxu0 0.0
    %408 = vmatpush1.msra.mxu0 %v109
    %409 = vmatprep.subr.mxu0 0.0
    %410 = vmatpush1.msra.mxu0 %v108
    %411 = vmatprep.subr.mxu0 0.0
    %412 = vmatpush1.msra.mxu0 %v107
    %413 = vmatprep.subr.mxu0 0.0
    %414 = vmatpush2.msra.mxu0 0.0
    %415 = vmatprep.subr.mxu0 0.0
    %416 = vmatpush2.msra.mxu0 0.0
    %417 = vmatprep.subr.mxu0 0.0
    %418 = vmatpush2.msra.mxu0 0.0
    %419 = vmatprep.subr.mxu0 0.0
    %420 = vmatpush2.msra.mxu0 0.0
    %421 = vmatprep.subr.mxu0 0.0
    %422 = vmatpush2.msra.mxu0 0.0
    %423 = vmatprep.subr.mxu0 0.0
    %424 = vmatpush2.msra.mxu0 0.0
    %425 = vmatprep.subr.mxu0 0.0
    %426 = vmatpush2.msra.mxu0 0.0
    %427 = vmatprep.subr.mxu0 0.0
    %428 = vmatpush2.msra.mxu0 0.0
    %429 = vmatprep.subr.mxu0 0.0
    %430 = vmatpush2.msra.mxu0 0.0
    %431 = vmatprep.subr.mxu0 0.0
    %432 = vmatpush2.msra.mxu0 0.0
    %433 = vmatprep.subr.mxu0 0.0
    %434 = vmatpush2.msra.mxu0 0.0
    %435 = vmatprep.subr.mxu0 0.0
    %436 = vmatpush2.msra.mxu0 0.0
    %437 = vmatprep.subr.mxu0 0.0
    %438 = vmatpush2.msra.mxu0 0.0
    %439 = vmatprep.subr.mxu0 0.0
    %440 = vmatpush2.msra.mxu0 0.0
    %441 = vmatprep.subr.mxu0 0.0
    %442 = vmatpush2.msra.mxu0 0.0
    %443 = vmatprep.subr.mxu0 0.0
    %444 = vmatpush2.msra.mxu0 0.0
    %445 = vmatprep.mubr.f32.mxu0 0.0
    %446 = vmatmul.mubr.f32.gmra.mxu0 %v379
    %v447 = vpop.f32.mrf.mxu0
    %v448 = vadd.f32 %v118, %v447
    %v449 = vpop.f32.mrf.mxu0
    %450 = vdwg.mxu0
    %vm451 = vcmp.gt.f32.partialorder %v448, 0.0
    %v452 = vmul.f32 %v448, 0.01
    %v453 = vsel %vm451, %v448, %v452
    %v455 = vsel %vm258, %v453, 0
    %457 = vmatprep.subr.mxu0 0.0
    %458 = vmatpush1.msra.mxu0 0.0
    %459 = vmatprep.subr.mxu0 0.0
    %460 = vmatpush1.msra.mxu0 0.0
    %461 = vmatprep.subr.mxu0 0.0
    %462 = vmatpush1.msra.mxu0 0.0
    %463 = vmatprep.subr.mxu0 0.0
    %464 = vmatpush1.msra.mxu0 0.0
    %465 = vmatprep.subr.mxu0 0.0
    %466 = vmatpush1.msra.mxu0 0.0
    %467 = vmatprep.subr.mxu0 0.0
    %468 = vmatpush1.msra.mxu0 0.0
    %469 = vmatprep.subr.mxu0 0.0
    %470 = vmatpush1.msra.mxu0 0.0
    %471 = vmatprep.subr.mxu0 0.0
    %472 = vmatpush1.msra.mxu0 0.0
    %473 = vmatprep.subr.mxu0 0.0
    %474 = vmatpush1.msra.mxu0 0.0
    %475 = vmatprep.subr.mxu0 0.0
    %476 = vmatpush1.msra.mxu0 0.0
    %477 = vmatprep.subr.mxu0 0.0
    %478 = vmatpush1.msra.mxu0 0.0
    %479 = vmatprep.subr.mxu0 0.0
    %480 = vmatpush1.msra.mxu0 0.0
    %481 = vmatprep.subr.mxu0 0.0
    %482 = vmatpush1.msra.mxu0 0.0
    %483 = vmatprep.subr.mxu0 0.0
    %484 = vmatpush1.msra.mxu0 0.0
    %485 = vmatprep.subr.mxu0 0.0
    %486 = vmatpush1.msra.mxu0 0.0
    %487 = vmatprep.subr.mxu0 0.0
    %488 = vmatpush1.msra.mxu0 %v112
    %489 = vmatprep.subr.mxu0 0.0
    %490 = vmatpush2.msra.mxu0 0.0
    %491 = vmatprep.subr.mxu0 0.0
    %492 = vmatpush2.msra.mxu0 0.0
    %493 = vmatprep.subr.mxu0 0.0
    %494 = vmatpush2.msra.mxu0 0.0
    %495 = vmatprep.subr.mxu0 0.0
    %496 = vmatpush2.msra.mxu0 0.0
    %497 = vmatprep.subr.mxu0 0.0
    %498 = vmatpush2.msra.mxu0 0.0
    %499 = vmatprep.subr.mxu0 0.0
    %500 = vmatpush2.msra.mxu0 0.0
    %501 = vmatprep.subr.mxu0 0.0
    %502 = vmatpush2.msra.mxu0 0.0
    %503 = vmatprep.subr.mxu0 0.0
    %504 = vmatpush2.msra.mxu0 0.0
    %505 = vmatprep.subr.mxu0 0.0
    %506 = vmatpush2.msra.mxu0 0.0
    %507 = vmatprep.subr.mxu0 0.0
    %508 = vmatpush2.msra.mxu0 0.0
    %509 = vmatprep.subr.mxu0 0.0
    %510 = vmatpush2.msra.mxu0 0.0
    %511 = vmatprep.subr.mxu0 0.0
    %512 = vmatpush2.msra.mxu0 0.0
    %513 = vmatprep.subr.mxu0 0.0
    %514 = vmatpush2.msra.mxu0 0.0
    %515 = vmatprep.subr.mxu0 0.0
    %516 = vmatpush2.msra.mxu0 0.0
    %517 = vmatprep.subr.mxu0 0.0
    %518 = vmatpush2.msra.mxu0 0.0
    %519 = vmatprep.subr.mxu0 0.0
    %520 = vmatpush2.msra.mxu0 0.0
    %521 = vmatprep.mubr.f32.mxu0 0.0
    %522 = vmatmul.mubr.f32.gmra.mxu0 %v455
    %v523 = vpop.f32.mrf.mxu0
    %v524 = vadd.f32 %v256, %v523
    %v525 = vpop.f32.mrf.mxu0
    %526 = vdwg.mxu0
    %v527 = vadd.f32 %v329, %v524
    %v528 = vxor.u32 %v527, 2147483648
    %v529 = vmul.f32 %v528, 1.442695
    %v530 = vpow.pop %v529
    %v531 = vadd.f32 %v530, 1.0
    %v532 = vrcp.pop %v531
    %v533 = vmul.f32 1.0, %v532
    %v534 = vlaneseq
    %v535 = vshrl.u32 %v534, 7
    %v536 = vsub.s32 0, %v535
    %v537 = vrot.slane %v533, %v536
    %539 = vbcast.lane.b32.xlu0 %v537, 256
    %v540 = vpop.permute.xlu0 %539
    %s542 = sor.u32 256, 8
    %543 = vbcast.lane.b32.xlu0 %v537, %s542
    %v544 = vpop.permute.xlu0 %543
    %s546 = sor.u32 256, 16
    %547 = vbcast.lane.b32.xlu0 %v537, %s546
    %v548 = vpop.permute.xlu0 %547
    %s550 = sor.u32 256, 24
    %551 = vbcast.lane.b32.xlu0 %v537, %s550
    %v552 = vpop.permute.xlu0 %551
    %v553 = vlaneseq
    %v554 = vshrl.u32 %v553, 7
    %v555 = vsub.s32 1, %v554
    %v556 = vrot.slane %v533, %v555
    %558 = vbcast.lane.b32.xlu0 %v556, 256
    %v559 = vpop.permute.xlu0 %558
    %s561 = sor.u32 256, 8
    %562 = vbcast.lane.b32.xlu0 %v556, %s561
    %v563 = vpop.permute.xlu0 %562
    %s565 = sor.u32 256, 16
    %566 = vbcast.lane.b32.xlu0 %v556, %s565
    %v567 = vpop.permute.xlu0 %566
    %s569 = sor.u32 256, 24
    %570 = vbcast.lane.b32.xlu0 %v556, %s569
    %v571 = vpop.permute.xlu0 %570
    %v572 = vmul.f32 %v35, %v540
    %v573 = vmul.f32 %v36, %v540
    %v574 = vmul.f32 %v37, %v544
    %v575 = vmul.f32 %v38, %v544
    %v576 = vmul.f32 %v39, %v548
    %v577 = vmul.f32 %v40, %v548
    %v578 = vmul.f32 %v41, %v552
    %v579 = vmul.f32 %v42, %v552
    %v580 = vmul.f32 %v43, %v559
    %v581 = vmul.f32 %v44, %v559
    %v582 = vmul.f32 %v45, %v563
    %v583 = vmul.f32 %v46, %v563
    %v584 = vmul.f32 %v47, %v567
    %v585 = vmul.f32 %v48, %v567
    %v586 = vmul.f32 %v49, %v571
    %v587 = vmul.f32 %v50, %v571
    %588 = vst [vmem:[#allocation5] sm:$0xff] %v572
    %589 = vst [vmem:[#allocation5 + $0x8] sm:$0xff] %v573
    %590 = vst [vmem:[#allocation5 + $0x10] sm:$0xff] %v574
    %591 = vst [vmem:[#allocation5 + $0x18] sm:$0xff] %v575
    %592 = vst [vmem:[#allocation5 + $0x20] sm:$0xff] %v576
    %593 = vst [vmem:[#allocation5 + $0x28] sm:$0xff] %v577
    %594 = vst [vmem:[#allocation5 + $0x30] sm:$0xff] %v578
    %595 = vst [vmem:[#allocation5 + $0x38] sm:$0xff] %v579
    %596 = vst [vmem:[#allocation5 + $0x40] sm:$0xff] %v580
    %597 = vst [vmem:[#allocation5 + $0x48] sm:$0xff] %v581
    %598 = vst [vmem:[#allocation5 + $0x50] sm:$0xff] %v582
    %599 = vst [vmem:[#allocation5 + $0x58] sm:$0xff] %v583
    %600 = vst [vmem:[#allocation5 + $0x60] sm:$0xff] %v584
    %601 = vst [vmem:[#allocation5 + $0x68] sm:$0xff] %v585
    %602 = vst [vmem:[#allocation5 + $0x70] sm:$0xff] %v586
    %603 = vst [vmem:[#allocation5 + $0x78] sm:$0xff] %v587
    // Predicated region
    $region26: #{tpu_custom_call.1} parent=1 // pred_check
      _
    $region27: #{tpu_custom_call.1} parent=1 // pred_check_branch
      %605 = sbr.rel (0) target = $region29
    $region28: #{tpu_custom_call.1} parent=1 // pred_region
      %s607 = ssub.s32 2048, 2048
      %608 = vsyncadd [#allocation4], %s607
      %s609 = sshll.u32 [#allocation5], 4
      %s610 = int_to_ptr.vmem [resolvable:$true] %s609
      %615 = dma.vmem_to_hbm [thread:$0]  %s610, 2048, %s5, [#allocation4], 256, 256, 16
    $region29: #{tpu_custom_call.1} parent=1 // pred_fallthru
      _
    // Predicated region
    $region30: #{tpu_custom_call.1} parent=1 // pred_check
      _
    $region31: #{tpu_custom_call.1} parent=1 // pred_check_branch
      %617 = sbr.rel (0) target = $region33
    $region32: #{tpu_custom_call.1} parent=1 // pred_region
      %618 = dma.done [#allocation4], 2048
    $region33: #{tpu_custom_call.1} parent=1 // pred_fallthru
      _
    %619 = vsyncpa [#allocation3], 1
    %620 = vsyncpa [#allocation4], 1

</llo_original>
